<compile_context>
chip_gen: v7x
topology: tpu7x:2x2x1
jax: 0.10.0
libtpu: 0.0.40
codegen_flags: <defaults>
</compile_context>

<pallas_src>
import functools

import jax
import jax.numpy as jnp
from jax.experimental import pallas as pl
from jax.experimental.pallas import tpu as pltpu


def temporal_block_kernel(xp_ref, w1_ref, b1_ref, w2_ref, b2_ref, wn_ref, bn_ref,
                          out_ref, h1p_ref, *, K, D, PAD, L):
    """One batch element per grid step, channel-rows / time-lanes layout.

    xp_ref : (1, C_in, PAD + L) bf16   left-causally-padded input
    w1_ref : (C_out, K*C_in)    bf16   conv1 weight, [o, t*C_in + c]  = w1[o, c, t]
    w2_ref : (C_out, K*C_out)   bf16   conv2 weight, [o, t*C_out + c] = w2[o, c, t]
    wn_ref : (C_out, C_in)      bf16   1x1 residual conv weight
    b*_ref : (C_out, 1)         f32    biases (broadcast along time/lanes)
    out_ref: (1, C_out, L)      f32
    h1p_ref: (C_out, PAD + L)   f32    scratch: causally padded conv1 activation
    """
    f32, bf16 = jnp.float32, jnp.bfloat16

    # ---- conv1: fused im2col over the K dilated taps -> one bf16 MXU matmul,
    # f32 accumulation. Only L output rows are computed (trailing PAD rows of
    # the PyTorch conv1 output are never read after the final [:, :, :L] slice).
    a1 = jnp.concatenate(
        [xp_ref[0, :, t * D:t * D + L] for t in range(K)], axis=0)        # (K*C_in, L) bf16
    h1 = jnp.maximum(
        jnp.dot(w1_ref[...], a1, preferred_element_type=f32) + b1_ref[...], 0.0)

    # ---- conv2: causal left pad of h1 via the VMEM scratch (no concatenate-with-
    # zeros temporary), then the same fused-tap matmul.
    if PAD > 0:
        h1p_ref[:, :PAD] = jnp.zeros((h1p_ref.shape[0], PAD), f32)
    h1p_ref[:, PAD:PAD + L] = h1
    a2 = jnp.concatenate(
        [h1p_ref[:, t * D:t * D + L] for t in range(K)], axis=0).astype(bf16)  # (K*C_out, L)
    h2 = jnp.maximum(
        jnp.dot(w2_ref[...], a2, preferred_element_type=f32) + b2_ref[...], 0.0)

    # ---- 1x1 residual conv on the (unpadded) input.
    res = jnp.dot(wn_ref[...], xp_ref[0, :, PAD:PAD + L],
                  preferred_element_type=f32) + bn_ref[...]

    out_ref[0] = (h2 + res).astype(out_ref.dtype)


def temporal_block(x_ncl, w1, b1, w2, b2, wn, bn, *, kernel_size, dilation, stride=1):
    """x_ncl: (N, C_in, L) like PyTorch. Weights in PyTorch Conv1d layout (O, I, K)."""
    assert stride == 1, "TODO(synk): stride != 1 not implemented"
    N, C_in, L = x_ncl.shape
    C_out = w1.shape[0]
    K, D = kernel_size, dilation
    PAD = (K - 1) * D
    bf16, f32 = jnp.bfloat16, jnp.float32

    # Glue (all tiny / halved-traffic): left-causal pad only + bf16 cast; weights
    # flattened tap-major to match the in-kernel im2col ordering.
    xp = jnp.pad(x_ncl, ((0, 0), (0, 0), (PAD, 0))).astype(bf16)       # (N, C_in, PAD+L)
    w1f = jnp.transpose(w1, (0, 2, 1)).reshape(C_out, K * C_in).astype(bf16)
    w2f = jnp.transpose(w2, (0, 2, 1)).reshape(C_out, K * C_out).astype(bf16)
    wnf = wn[:, :, 0].astype(bf16)                                      # (C_out, C_in)
    b1c = b1[:, None].astype(f32)
    b2c = b2[:, None].astype(f32)
    bnc = bn[:, None].astype(f32)

    kern = functools.partial(temporal_block_kernel, K=K, D=D, PAD=PAD, L=L)

    out = pl.pallas_call(
        kern,
        out_shape=jax.ShapeDtypeStruct((N, C_out, L), x_ncl.dtype),
        grid_spec=pltpu.PrefetchScalarGridSpec(
            num_scalar_prefetch=0,
            grid=(N,),
            in_specs=[
                pl.BlockSpec((1, C_in, PAD + L), lambda b: (b, 0, 0)),
                pl.BlockSpec((C_out, K * C_in), lambda b: (0, 0)),
                pl.BlockSpec((C_out, 1), lambda b: (0, 0)),
                pl.BlockSpec((C_out, K * C_out), lambda b: (0, 0)),
                pl.BlockSpec((C_out, 1), lambda b: (0, 0)),
                pl.BlockSpec((C_out, C_in), lambda b: (0, 0)),
                pl.BlockSpec((C_out, 1), lambda b: (0, 0)),
            ],
            out_specs=pl.BlockSpec((1, C_out, L), lambda b: (b, 0, 0)),
            scratch_shapes=[pltpu.VMEM((C_out, PAD + L), f32)],
        ),
        compiler_params=pltpu.CompilerParams(dimension_semantics=("parallel",)),
    )(xp, w1f, b1c, w2f, b2c, wnf, bnc)
    return out                                                          # (N, C_out, L)


def reference_forward(x, w1, b1, w2, b2, wn, bn, *, kernel_size, dilation):
    """Plain-JAX reference matching the PyTorch forward, with the same bf16 MXU
    operands / f32 accumulation as the kernel (so comparison tolerances stay tight)."""
    K, D = kernel_size, dilation
    pad = (K - 1) * D
    dn = ('NCH', 'OIH', 'NCH')
    bf16, f32 = jnp.bfloat16, jnp.float32
    c1 = jax.lax.conv_general_dilated(x.astype(bf16), w1.astype(bf16), (1,),
                                      [(pad, pad)], rhs_dilation=(D,),
                                      dimension_numbers=dn, preferred_element_type=f32)
    c1 = jnp.maximum(c1 + b1[None, :, None], 0.0)
    c2 = jax.lax.conv_general_dilated(c1.astype(bf16), w2.astype(bf16), (1,),
                                      [(pad, pad)], rhs_dilation=(D,),
                                      dimension_numbers=dn, preferred_element_type=f32)
    c2 = jnp.maximum(c2 + b2[None, :, None], 0.0)
    net = jax.lax.conv_general_dilated(x.astype(bf16), wn.astype(bf16), (1,),
                                       [(0, 0)], dimension_numbers=dn,
                                       preferred_element_type=f32)
    net = net + bn[None, :, None]
    return c2[:, :, :x.shape[2]] + net


if __name__ == "__main__":
    # Small deterministic config consistent with the module's forward.
    N, C_in, C_out, L = 2, 4, 8, 16
    kernel_size, stride, dilation = 3, 1, 2

    key = jax.random.PRNGKey(0)
    k = jax.random.split(key, 7)
    x = jax.random.normal(k[0], (N, C_in, L), jnp.float32)
    w1 = jax.random.normal(k[1], (C_out, C_in, kernel_size), jnp.float32) * 0.3
    b1 = jax.random.normal(k[2], (C_out,), jnp.float32) * 0.1
    w2 = jax.random.normal(k[3], (C_out, C_out, kernel_size), jnp.float32) * 0.3
    b2 = jax.random.normal(k[4], (C_out,), jnp.float32) * 0.1
    wn = jax.random.normal(k[5], (C_out, C_in, 1), jnp.float32) * 0.3
    bn = jax.random.normal(k[6], (C_out,), jnp.float32) * 0.1

    out = temporal_block(x, w1, b1, w2, b2, wn, bn,
                         kernel_size=kernel_size, dilation=dilation, stride=stride)
    out = jax.block_until_ready(out)

    ref = reference_forward(x, w1, b1, w2, b2, wn, bn,
                            kernel_size=kernel_size, dilation=dilation)
    ref = jax.block_until_ready(ref)

    assert out.shape == (N, C_out, L)
    assert jnp.allclose(out, ref, atol=1e-3, rtol=1e-3), "mismatch vs reference"
    print("KERNEL_OK")
</pallas_src>

<mosaic_0001>
module attributes {stable_mosaic.version = 11 : i64} {
  func.func @temporal_block_kernel(%arg0: i32, %arg1: memref<1x4x20xbf16, #tpu.memory_space<vmem>>, %arg2: memref<8x12xbf16, #tpu.memory_space<vmem>>, %arg3: memref<8x1xf32, #tpu.memory_space<vmem>>, %arg4: memref<8x24xbf16, #tpu.memory_space<vmem>>, %arg5: memref<8x1xf32, #tpu.memory_space<vmem>>, %arg6: memref<8x4xbf16, #tpu.memory_space<vmem>>, %arg7: memref<8x1xf32, #tpu.memory_space<vmem>>, %arg8: memref<1x8x16xf32, #tpu.memory_space<vmem>>, %arg9: memref<8x20xf32, #tpu.memory_space<vmem>>) attributes {dimension_semantics = [#tpu.dimension_semantics<parallel>], iteration_bounds = array<i64: 2>, scalar_prefetch = 0 : i64, scratch_operands = 1 : i64, tpu.core_type = #tpu.core_type<tc>, window_params = [{transform_indices = @transform_0, window_bounds = array<i64: 1, 4, 20>}, {pipeline_mode = #tpu.pipeline_mode<synchronous>, transform_indices = @transform_1, window_bounds = array<i64: 8, 12>}, {pipeline_mode = #tpu.pipeline_mode<synchronous>, transform_indices = @transform_2, window_bounds = array<i64: 8, 1>}, {pipeline_mode = #tpu.pipeline_mode<synchronous>, transform_indices = @transform_3, window_bounds = array<i64: 8, 24>}, {pipeline_mode = #tpu.pipeline_mode<synchronous>, transform_indices = @transform_4, window_bounds = array<i64: 8, 1>}, {pipeline_mode = #tpu.pipeline_mode<synchronous>, transform_indices = @transform_5, window_bounds = array<i64: 8, 4>}, {pipeline_mode = #tpu.pipeline_mode<synchronous>, transform_indices = @transform_6, window_bounds = array<i64: 8, 1>}, {transform_indices = @transform_7, window_bounds = array<i64: 1, 8, 16>}]} {
    %c0 = arith.constant 0 : index
    %c0_0 = arith.constant 0 : index
    %c0_1 = arith.constant 0 : index
    %0 = vector.load %arg1[%c0, %c0_0, %c0_1] : memref<1x4x20xbf16, #tpu.memory_space<vmem>>, vector<1x4x16xbf16>
    %1 = vector.shape_cast %0 : vector<1x4x16xbf16> to vector<4x16xbf16>
    %c0_2 = arith.constant 0 : index
    %c0_3 = arith.constant 0 : index
    %c2 = arith.constant 2 : index
    %2 = vector.load %arg1[%c0_2, %c0_3, %c2] : memref<1x4x20xbf16, #tpu.memory_space<vmem>>, vector<1x4x16xbf16>
    %3 = vector.shape_cast %2 : vector<1x4x16xbf16> to vector<4x16xbf16>
    %c0_4 = arith.constant 0 : index
    %c0_5 = arith.constant 0 : index
    %c4 = arith.constant 4 : index
    %4 = vector.load %arg1[%c0_4, %c0_5, %c4] : memref<1x4x20xbf16, #tpu.memory_space<vmem>>, vector<1x4x16xbf16>
    %5 = vector.shape_cast %4 : vector<1x4x16xbf16> to vector<4x16xbf16>
    %6 = tpu.concatenate %1, %3, %5 in 0 : vector<4x16xbf16>, vector<4x16xbf16>, vector<4x16xbf16> -> vector<12x16xbf16>
    %c0_6 = arith.constant 0 : index
    %c0_7 = arith.constant 0 : index
    %7 = vector.load %arg2[%c0_6, %c0_7] : memref<8x12xbf16, #tpu.memory_space<vmem>>, vector<8x12xbf16>
    %cst = arith.constant dense<0.000000e+00> : vector<8x16xf32>
    %8 = tpu.matmul %7, %6, %cst {dimension_numbers = #tpu.dot_dimension_numbers<[1], [0], [0], [1], [0, 0, 1, 1], [], []>} : vector<8x12xbf16>, vector<12x16xbf16>, vector<8x16xf32> -> vector<8x16xf32>
    %c0_8 = arith.constant 0 : index
    %c0_9 = arith.constant 0 : index
    %9 = vector.load %arg3[%c0_8, %c0_9] : memref<8x1xf32, #tpu.memory_space<vmem>>, vector<8x1xf32>
    %10 = vector.broadcast %9 : vector<8x1xf32> to vector<8x16xf32>
    %11 = arith.addf %8, %10 : vector<8x16xf32>
    %cst_10 = arith.constant 0.000000e+00 : f32
    %12 = vector.broadcast %cst_10 : f32 to vector<8x16xf32>
    %13 = arith.maximumf %11, %12 : vector<8x16xf32>
    %cst_11 = arith.constant 0.000000e+00 : f32
    %14 = vector.broadcast %cst_11 : f32 to vector<8x4xf32>
    %c0_12 = arith.constant 0 : index
    %c0_13 = arith.constant 0 : index
    %15 = vector.load %arg9[%c0_12, %c0_13] : memref<8x20xf32, #tpu.memory_space<vmem>>, vector<8x4xf32>
    tpu.vector_store %arg9[%c0_12, %c0_13], %14 {strides = array<i32>} : memref<8x20xf32, #tpu.memory_space<vmem>>, vector<8x4xf32>,
    %c0_14 = arith.constant 0 : index
    %c4_15 = arith.constant 4 : index
    %16 = vector.load %arg9[%c0_14, %c4_15] : memref<8x20xf32, #tpu.memory_space<vmem>>, vector<8x16xf32>
    tpu.vector_store %arg9[%c0_14, %c4_15], %13 {strides = array<i32>} : memref<8x20xf32, #tpu.memory_space<vmem>>, vector<8x16xf32>,
    %c0_16 = arith.constant 0 : index
    %c0_17 = arith.constant 0 : index
    %17 = vector.load %arg9[%c0_16, %c0_17] : memref<8x20xf32, #tpu.memory_space<vmem>>, vector<8x16xf32>
    %c0_18 = arith.constant 0 : index
    %c2_19 = arith.constant 2 : index
    %18 = vector.load %arg9[%c0_18, %c2_19] : memref<8x20xf32, #tpu.memory_space<vmem>>, vector<8x16xf32>
    %c0_20 = arith.constant 0 : index
    %c4_21 = arith.constant 4 : index
    %19 = vector.load %arg9[%c0_20, %c4_21] : memref<8x20xf32, #tpu.memory_space<vmem>>, vector<8x16xf32>
    %20 = tpu.concatenate %17, %18, %19 in 0 : vector<8x16xf32>, vector<8x16xf32>, vector<8x16xf32> -> vector<24x16xf32>
    %21 = arith.truncf %20 : vector<24x16xf32> to vector<24x16xbf16>
    %c0_22 = arith.constant 0 : index
    %c0_23 = arith.constant 0 : index
    %22 = vector.load %arg4[%c0_22, %c0_23] : memref<8x24xbf16, #tpu.memory_space<vmem>>, vector<8x24xbf16>
    %cst_24 = arith.constant dense<0.000000e+00> : vector<8x16xf32>
    %23 = tpu.matmul %22, %21, %cst_24 {dimension_numbers = #tpu.dot_dimension_numbers<[1], [0], [0], [1], [0, 0, 1, 1], [], []>} : vector<8x24xbf16>, vector<24x16xbf16>, vector<8x16xf32> -> vector<8x16xf32>
    %c0_25 = arith.constant 0 : index
    %c0_26 = arith.constant 0 : index
    %24 = vector.load %arg5[%c0_25, %c0_26] : memref<8x1xf32, #tpu.memory_space<vmem>>, vector<8x1xf32>
    %25 = vector.broadcast %24 : vector<8x1xf32> to vector<8x16xf32>
    %26 = arith.addf %23, %25 : vector<8x16xf32>
    %cst_27 = arith.constant 0.000000e+00 : f32
    %27 = vector.broadcast %cst_27 : f32 to vector<8x16xf32>
    %28 = arith.maximumf %26, %27 : vector<8x16xf32>
    %c0_28 = arith.constant 0 : index
    %c0_29 = arith.constant 0 : index
    %29 = vector.load %arg6[%c0_28, %c0_29] : memref<8x4xbf16, #tpu.memory_space<vmem>>, vector<8x4xbf16>
    %c0_30 = arith.constant 0 : index
    %c0_31 = arith.constant 0 : index
    %c4_32 = arith.constant 4 : index
    %30 = vector.load %arg1[%c0_30, %c0_31, %c4_32] : memref<1x4x20xbf16, #tpu.memory_space<vmem>>, vector<1x4x16xbf16>
    %31 = vector.shape_cast %30 : vector<1x4x16xbf16> to vector<4x16xbf16>
    %cst_33 = arith.constant dense<0.000000e+00> : vector<8x16xf32>
    %32 = tpu.matmul %29, %31, %cst_33 {dimension_numbers = #tpu.dot_dimension_numbers<[1], [0], [0], [1], [0, 0, 1, 1], [], []>} : vector<8x4xbf16>, vector<4x16xbf16>, vector<8x16xf32> -> vector<8x16xf32>
    %c0_34 = arith.constant 0 : index
    %c0_35 = arith.constant 0 : index
    %33 = vector.load %arg7[%c0_34, %c0_35] : memref<8x1xf32, #tpu.memory_space<vmem>>, vector<8x1xf32>
    %34 = vector.broadcast %33 : vector<8x1xf32> to vector<8x16xf32>
    %35 = arith.addf %32, %34 : vector<8x16xf32>
    %36 = arith.addf %28, %35 : vector<8x16xf32>
    %c0_36 = arith.constant 0 : index
    %c0_37 = arith.constant 0 : index
    %c0_38 = arith.constant 0 : index
    %37 = vector.load %arg8[%c0_36, %c0_37, %c0_38] : memref<1x8x16xf32, #tpu.memory_space<vmem>>, vector<1x8x16xf32>
    %38 = vector.shape_cast %37 : vector<1x8x16xf32> to vector<8x16xf32>
    %39 = vector.shape_cast %36 : vector<8x16xf32> to vector<1x8x16xf32>
    tpu.vector_store %arg8[%c0_36, %c0_37, %c0_38], %39 {strides = array<i32>} : memref<1x8x16xf32, #tpu.memory_space<vmem>>, vector<1x8x16xf32>,
    return
  }
  func.func @transform_0(%arg0: i32) -> (i32, i32, i32) {
    %c0_i32 = arith.constant 0 : i32
    %c0_i32_0 = arith.constant 0 : i32
    %c0_i32_1 = arith.constant 0 : i32
    return %arg0, %c0_i32, %c0_i32_0 : i32, i32, i32
  }
  func.func @transform_1(%arg0: i32) -> (i32, i32) {
    %c0_i32 = arith.constant 0 : i32
    %c0_i32_0 = arith.constant 0 : i32
    %c0_i32_1 = arith.constant 0 : i32
    return %c0_i32, %c0_i32_0 : i32, i32
  }
  func.func @transform_2(%arg0: i32) -> (i32, i32) {
    %c0_i32 = arith.constant 0 : i32
    %c0_i32_0 = arith.constant 0 : i32
    %c0_i32_1 = arith.constant 0 : i32
    return %c0_i32, %c0_i32_0 : i32, i32
  }
  func.func @transform_3(%arg0: i32) -> (i32, i32) {
    %c0_i32 = arith.constant 0 : i32
    %c0_i32_0 = arith.constant 0 : i32
    %c0_i32_1 = arith.constant 0 : i32
    return %c0_i32, %c0_i32_0 : i32, i32
  }
  func.func @transform_4(%arg0: i32) -> (i32, i32) {
    %c0_i32 = arith.constant 0 : i32
    %c0_i32_0 = arith.constant 0 : i32
    %c0_i32_1 = arith.constant 0 : i32
    return %c0_i32, %c0_i32_0 : i32, i32
  }
  func.func @transform_5(%arg0: i32) -> (i32, i32) {
    %c0_i32 = arith.constant 0 : i32
    %c0_i32_0 = arith.constant 0 : i32
    %c0_i32_1 = arith.constant 0 : i32
    return %c0_i32, %c0_i32_0 : i32, i32
  }
  func.func @transform_6(%arg0: i32) -> (i32, i32) {
    %c0_i32 = arith.constant 0 : i32
    %c0_i32_0 = arith.constant 0 : i32
    %c0_i32_1 = arith.constant 0 : i32
    return %c0_i32, %c0_i32_0 : i32, i32
  }
  func.func @transform_7(%arg0: i32) -> (i32, i32, i32) {
    %c0_i32 = arith.constant 0 : i32
    %c0_i32_0 = arith.constant 0 : i32
    %c0_i32_1 = arith.constant 0 : i32
    return %arg0, %c0_i32, %c0_i32_0 : i32, i32, i32
  }
}

</mosaic_0001>

<llo_original>
// kernel: tpu_custom_call.1
$region0: #{tpu_custom_call.1}
  #allocation0 [shape = 'u32[]', space=smem, size = 0x4, offset = 0x4, fixed_abs, tag = 'smem constant byte address 0x4 - core index']
  #allocation1 [shape = 'u32[144,128]{1,0:T(1,128)}', space=vmem, size = 0x12000, scoped, tag = 'internal scratch']
  #allocation2 [shape = 'f32[8,20]{1,0:T(8,128)}', space=vmem, size = 0x1000, scoped, tag = 'scratch operand']
  %s0 = inlined_call_operand.vmem [shape: bf16[2,4,20], index: 0, kind: input, shape index: {}]
  %s1 = inlined_call_operand.vmem [shape: bf16[8,12], index: 1, kind: input, shape index: {}]
  %s2 = inlined_call_operand.vmem [shape: f32[8,1], index: 2, kind: input, shape index: {}]
  %s3 = inlined_call_operand.vmem [shape: bf16[8,24], index: 3, kind: input, shape index: {}]
  %s4 = inlined_call_operand.vmem [shape: f32[8,1], index: 4, kind: input, shape index: {}]
  %s5 = inlined_call_operand.vmem [shape: bf16[8,4], index: 5, kind: input, shape index: {}]
  %s6 = inlined_call_operand.vmem [shape: f32[8,1], index: 6, kind: input, shape index: {}]
  %s7 = inlined_call_operand.hbm [shape: f32[2,8,16], index: 7, kind: output, shape index: {}]
  %s8 = sld [smem:[#allocation0]]
  $region61: #{tpu_custom_call.1} parent=0
    _
  %s10 = ssub.s32 1, %s8
  %s11 = scalar_select 0, %s10, %s8
  $region1: #{tpu_custom_call.1} parent=0
    #allocation3 [shape = 'u8[8192]{0}', space=vmem, size = 0x2000, scoped, tag = 'output window, operand 0']
    #allocation4 [shape = 's32[2]{0}', space=sflag, size = 0x8, scoped, tag = 'scoped memory for tpu_custom_call.1']
    %12 = vsyncpa [#allocation4], 0
    %s13 = scalar_lea.sflag [#allocation4], 1
    %14 = vsyncpa %s13, 0
    loop: start=0, step=1, limit=4
    $region2: #{tpu_custom_call.1} parent=1 // loop_pre_header
      _
    $region3: #{tpu_custom_call.1} parent=1 // loop_header
      %s16 = sphi 0, %s20
      %p17 = scmp.ge.s32.totalorder %s16, 4
      %s26 = sphi 0, %s28
      %s29 = sphi 0, %s26
      %s30 = sphi 0, %s29
      %s46 = sphi 0, %s30
      %s50 = sphi 0, %s50
      %s52 = sphi 0, %s50
      %s53 = sphi 0, %s52
      %s67 = sphi 0, %s53
      %s71 = sphi 0, %s71
      %s73 = sphi 0, %s71
      %s74 = sphi 0, %s73
      %s88 = sphi 0, %s74
      %s92 = sphi 0, %s92
      %s94 = sphi 0, %s92
      %s95 = sphi 0, %s94
      %s109 = sphi 0, %s95
      %s113 = sphi 0, %s113
      %s115 = sphi 0, %s113
      %s116 = sphi 0, %s115
      %s130 = sphi 0, %s116
      %s134 = sphi 0, %s134
      %s136 = sphi 0, %s134
      %s137 = sphi 0, %s136
      %s151 = sphi 0, %s137
      %s155 = sphi 0, %s155
      %s157 = sphi 0, %s155
      %s158 = sphi 0, %s157
      %s172 = sphi 0, %s158
      %s178 = sphi 0, %s180
      %s181 = sphi 0, %s178
      %s182 = sphi 0, %s181
      %s198 = sphi 0, %s182
    $region4: #{tpu_custom_call.1} parent=1 // loop_header_branch
      %19 = sbr.rel (%p17) target = $region8
    $region5: #{tpu_custom_call.1} parent=1 // loop_body
      %s21 = ssub.s32 %s16, 1
      %s22 = ssub.s32 %s16, 2
      %s23 = sadd.s32 %s16, 1
      %s24 = ssub.s32 %s16, %s23
      %p25 = scmp.eq.s32.totalorder %s24, 0
      %s27 = sadd.s32 %s26, 1
      %s28 = scalar_select %p25, %s26, %s27
      %p31 = pneg %p25
      %p32 = scmp.eq.s32.totalorder %s16, 1
      %p33 = por %p31, %p32
      %p34 = scmp.ne.s32.totalorder %s26, %s29
      %p35 = scmp.eq.s32.totalorder %s16, 0
      %p36 = por %p34, %p35
      %p37 = scmp.ne.s32.totalorder %s26, %s29
      %p38 = scmp.eq.s32.totalorder %s21, 1
      %p39 = por %p37, %p38
      %p40 = scmp.ne.s32.totalorder %s29, %s30
      %p41 = scmp.eq.s32.totalorder %s21, 0
      %p42 = por %p40, %p41
      %p43 = scmp.ne.s32.totalorder %s29, %s30
      %p44 = scmp.eq.s32.totalorder %s22, 1
      %p45 = por %p43, %p44
      %p47 = scmp.ne.s32.totalorder %s30, %s46
      %p48 = scmp.eq.s32.totalorder %s22, 0
      %p49 = por %p47, %p48
      %s51 = sadd.s32 %s50, 1
      %p54 = scmp.eq.s32.totalorder %s16, 1
      %p55 = scmp.ne.s32.totalorder %s50, %s52
      %p56 = scmp.eq.s32.totalorder %s16, 0
      %p57 = por %p55, %p56
      %p58 = scmp.ne.s32.totalorder %s50, %s52
      %p59 = scmp.eq.s32.totalorder %s21, 1
      %p60 = por %p58, %p59
      %p61 = scmp.ne.s32.totalorder %s52, %s53
      %p62 = scmp.eq.s32.totalorder %s21, 0
      %p63 = por %p61, %p62
      %p64 = scmp.ne.s32.totalorder %s52, %s53
      %p65 = scmp.eq.s32.totalorder %s22, 1
      %p66 = por %p64, %p65
      %p68 = scmp.ne.s32.totalorder %s53, %s67
      %p69 = scmp.eq.s32.totalorder %s22, 0
      %p70 = por %p68, %p69
      %s72 = sadd.s32 %s71, 1
      %p75 = scmp.eq.s32.totalorder %s16, 1
      %p76 = scmp.ne.s32.totalorder %s71, %s73
      %p77 = scmp.eq.s32.totalorder %s16, 0
      %p78 = por %p76, %p77
      %p79 = scmp.ne.s32.totalorder %s71, %s73
      %p80 = scmp.eq.s32.totalorder %s21, 1
      %p81 = por %p79, %p80
      %p82 = scmp.ne.s32.totalorder %s73, %s74
      %p83 = scmp.eq.s32.totalorder %s21, 0
      %p84 = por %p82, %p83
      %p85 = scmp.ne.s32.totalorder %s73, %s74
      %p86 = scmp.eq.s32.totalorder %s22, 1
      %p87 = por %p85, %p86
      %p89 = scmp.ne.s32.totalorder %s74, %s88
      %p90 = scmp.eq.s32.totalorder %s22, 0
      %p91 = por %p89, %p90
      %s93 = sadd.s32 %s92, 1
      %p96 = scmp.eq.s32.totalorder %s16, 1
      %p97 = scmp.ne.s32.totalorder %s92, %s94
      %p98 = scmp.eq.s32.totalorder %s16, 0
      %p99 = por %p97, %p98
      %p100 = scmp.ne.s32.totalorder %s92, %s94
      %p101 = scmp.eq.s32.totalorder %s21, 1
      %p102 = por %p100, %p101
      %p103 = scmp.ne.s32.totalorder %s94, %s95
      %p104 = scmp.eq.s32.totalorder %s21, 0
      %p105 = por %p103, %p104
      %p106 = scmp.ne.s32.totalorder %s94, %s95
      %p107 = scmp.eq.s32.totalorder %s22, 1
      %p108 = por %p106, %p107
      %p110 = scmp.ne.s32.totalorder %s95, %s109
      %p111 = scmp.eq.s32.totalorder %s22, 0
      %p112 = por %p110, %p111
      %s114 = sadd.s32 %s113, 1
      %p117 = scmp.eq.s32.totalorder %s16, 1
      %p118 = scmp.ne.s32.totalorder %s113, %s115
      %p119 = scmp.eq.s32.totalorder %s16, 0
      %p120 = por %p118, %p119
      %p121 = scmp.ne.s32.totalorder %s113, %s115
      %p122 = scmp.eq.s32.totalorder %s21, 1
      %p123 = por %p121, %p122
      %p124 = scmp.ne.s32.totalorder %s115, %s116
      %p125 = scmp.eq.s32.totalorder %s21, 0
      %p126 = por %p124, %p125
      %p127 = scmp.ne.s32.totalorder %s115, %s116
      %p128 = scmp.eq.s32.totalorder %s22, 1
      %p129 = por %p127, %p128
      %p131 = scmp.ne.s32.totalorder %s116, %s130
      %p132 = scmp.eq.s32.totalorder %s22, 0
      %p133 = por %p131, %p132
      %s135 = sadd.s32 %s134, 1
      %p138 = scmp.eq.s32.totalorder %s16, 1
      %p139 = scmp.ne.s32.totalorder %s134, %s136
      %p140 = scmp.eq.s32.totalorder %s16, 0
      %p141 = por %p139, %p140
      %p142 = scmp.ne.s32.totalorder %s134, %s136
      %p143 = scmp.eq.s32.totalorder %s21, 1
      %p144 = por %p142, %p143
      %p145 = scmp.ne.s32.totalorder %s136, %s137
      %p146 = scmp.eq.s32.totalorder %s21, 0
      %p147 = por %p145, %p146
      %p148 = scmp.ne.s32.totalorder %s136, %s137
      %p149 = scmp.eq.s32.totalorder %s22, 1
      %p150 = por %p148, %p149
      %p152 = scmp.ne.s32.totalorder %s137, %s151
      %p153 = scmp.eq.s32.totalorder %s22, 0
      %p154 = por %p152, %p153
      %s156 = sadd.s32 %s155, 1
      %p159 = scmp.eq.s32.totalorder %s16, 1
      %p160 = scmp.ne.s32.totalorder %s155, %s157
      %p161 = scmp.eq.s32.totalorder %s16, 0
      %p162 = por %p160, %p161
      %p163 = scmp.ne.s32.totalorder %s155, %s157
      %p164 = scmp.eq.s32.totalorder %s21, 1
      %p165 = por %p163, %p164
      %p166 = scmp.ne.s32.totalorder %s157, %s158
      %p167 = scmp.eq.s32.totalorder %s21, 0
      %p168 = por %p166, %p167
      %p169 = scmp.ne.s32.totalorder %s157, %s158
      %p170 = scmp.eq.s32.totalorder %s22, 1
      %p171 = por %p169, %p170
      %p173 = scmp.ne.s32.totalorder %s158, %s172
      %p174 = scmp.eq.s32.totalorder %s22, 0
      %p175 = por %p173, %p174
      %s176 = ssub.s32 %s16, %s23
      %p177 = scmp.eq.s32.totalorder %s176, 0
      %s179 = sadd.s32 %s178, 1
      %s180 = scalar_select %p177, %s178, %s179
      %p183 = pneg %p177
      %p184 = scmp.eq.s32.totalorder %s16, 1
      %p185 = por %p183, %p184
      %p186 = scmp.ne.s32.totalorder %s178, %s181
      %p187 = scmp.eq.s32.totalorder %s16, 0
      %p188 = por %p186, %p187
      %p189 = scmp.ne.s32.totalorder %s178, %s181
      %p190 = scmp.eq.s32.totalorder %s21, 1
      %p191 = por %p189, %p190
      %p192 = scmp.ne.s32.totalorder %s181, %s182
      %p193 = scmp.eq.s32.totalorder %s21, 0
      %p194 = por %p192, %p193
      %p195 = scmp.ne.s32.totalorder %s181, %s182
      %p196 = scmp.eq.s32.totalorder %s22, 1
      %p197 = por %p195, %p196
      %p199 = scmp.ne.s32.totalorder %s182, %s198
      %p200 = scmp.eq.s32.totalorder %s22, 0
      %p201 = por %p199, %p200
      %p202 = scmp.le.s32.totalorder 1, %s16
      %p203 = scmp.lt.s32.totalorder %s16, 3
      %p204 = pnand %p202, %p203
      %p205 = pneg %p204
      // Predicated region
      $region9: #{tpu_custom_call.1} parent=5 // pred_check
        _
      $region10: #{tpu_custom_call.1} parent=5 // pred_check_branch
        %207 = sbr.rel (%p204) target = $region12
      $region11: #{tpu_custom_call.1} parent=5 // pred_region
        %s208 = ssub.s32 %s16, 1
        // Predicated region
        $region13: #{tpu_custom_call.1} parent=11 // pred_check
          %p209 = pneg %p63
        $region14: #{tpu_custom_call.1} parent=11 // pred_check_branch
          %211 = sbr.rel (%p209) target = $region16
        $region15: #{tpu_custom_call.1} parent=11 // pred_region
          _
        $region16: #{tpu_custom_call.1} parent=11 // pred_fallthru
          _
        // Predicated region
        $region17: #{tpu_custom_call.1} parent=11 // pred_check
          %p212 = pneg %p84
        $region18: #{tpu_custom_call.1} parent=11 // pred_check_branch
          %214 = sbr.rel (%p212) target = $region20
        $region19: #{tpu_custom_call.1} parent=11 // pred_region
          _
        $region20: #{tpu_custom_call.1} parent=11 // pred_fallthru
          _
        // Predicated region
        $region21: #{tpu_custom_call.1} parent=11 // pred_check
          %p215 = pneg %p105
        $region22: #{tpu_custom_call.1} parent=11 // pred_check_branch
          %217 = sbr.rel (%p215) target = $region24
        $region23: #{tpu_custom_call.1} parent=11 // pred_region
          _
        $region24: #{tpu_custom_call.1} parent=11 // pred_fallthru
          _
        // Predicated region
        $region25: #{tpu_custom_call.1} parent=11 // pred_check
          %p218 = pneg %p126
        $region26: #{tpu_custom_call.1} parent=11 // pred_check_branch
          %220 = sbr.rel (%p218) target = $region28
        $region27: #{tpu_custom_call.1} parent=11 // pred_region
          _
        $region28: #{tpu_custom_call.1} parent=11 // pred_fallthru
          _
        // Predicated region
        $region29: #{tpu_custom_call.1} parent=11 // pred_check
          %p221 = pneg %p147
        $region30: #{tpu_custom_call.1} parent=11 // pred_check_branch
          %223 = sbr.rel (%p221) target = $region32
        $region31: #{tpu_custom_call.1} parent=11 // pred_region
          _
        $region32: #{tpu_custom_call.1} parent=11 // pred_fallthru
          _
        // Predicated region
        $region33: #{tpu_custom_call.1} parent=11 // pred_check
          %p224 = pneg %p168
        $region34: #{tpu_custom_call.1} parent=11 // pred_check_branch
          %226 = sbr.rel (%p224) target = $region36
        $region35: #{tpu_custom_call.1} parent=11 // pred_region
          _
        $region36: #{tpu_custom_call.1} parent=11 // pred_fallthru
          _
      $region12: #{tpu_custom_call.1} parent=5 // pred_fallthru
        _
      %p227 = scmp.lt.s32.totalorder %s16, 2
      // Predicated region
      $region37: #{tpu_custom_call.1} parent=5 // pred_check
        %p228 = pneg %p227
      $region38: #{tpu_custom_call.1} parent=5 // pred_check_branch
        %230 = sbr.rel (%p228) target = $region40
      $region39: #{tpu_custom_call.1} parent=5 // pred_region
        // Predicated region
        $region41: #{tpu_custom_call.1} parent=39 // pred_check
          %p231 = pneg %p36
        $region42: #{tpu_custom_call.1} parent=39 // pred_check_branch
          %233 = sbr.rel (%p231) target = $region44
        $region43: #{tpu_custom_call.1} parent=39 // pred_region
          %p234 = scmp.lt.s32.totalorder %s16, 1
          %s235 = scalar_select %p234, %s16, 1
          %s236 = smul.addr %s235, 2
          %s237 = scalar_lea.vmem %s0, %s236
        $region44: #{tpu_custom_call.1} parent=39 // pred_fallthru
          _
      $region40: #{tpu_custom_call.1} parent=5 // pred_fallthru
        _
      %p238 = scmp.le.s32.totalorder 1, %s16
      %p239 = scmp.lt.s32.totalorder %s16, 3
      %p240 = pnand %p238, %p239
      %p241 = pneg %p240
      // Predicated region
      $region45: #{tpu_custom_call.1} parent=5 // pred_check
        _
      $region46: #{tpu_custom_call.1} parent=5 // pred_check_branch
        %243 = sbr.rel (%p240) target = $region48
      $region47: #{tpu_custom_call.1} parent=5 // pred_region
        %s244 = ssub.s32 %s16, 1
        %p245 = scmp.lt.s32.totalorder %s21, 1
        %s246 = scalar_select %p245, %s21, 1
        %s247 = smul.addr %s246, 2
        %s248 = scalar_lea.vmem %s0, %s247
        %p249 = pneg %p42
        %p250 = pneg %p39
        %p251 = pneg %p63
        %p252 = pneg %p60
        %p253 = pneg %p84
        %p254 = pneg %p81
        %p255 = pneg %p105
        %p256 = pneg %p102
        %p257 = pneg %p126
        %p258 = pneg %p123
        %p259 = pneg %p147
        %p260 = pneg %p144
        %p261 = pneg %p168
        %p262 = pneg %p165
        %p263 = pneg %p194
        %p264 = pneg %p191
        %s265 = sand.u32 %s181, 1
        %s266 = scalar_lea.sflag [#allocation4], %s265
        %s267 = sand.u32 %s181, 1
        %s268 = smul.addr %s267, 8
        %s269 = scalar_lea.vmem [#allocation3], %s268
        %p270 = scmp.lt.s32.totalorder %s21, 1
        %s271 = scalar_select %p270, %s21, 1
        %s272 = smul.addr %s271, 2
        %s273 = scalar_lea.vmem %s0, %s272
        %v275 = vld [vmem:[%s273] sm:$0x3]
        %v277 = vcombine.low %v275, %v275
        %v279 = vunpack.c.l.s4 1983009808
        %v280 = vunpack.c.0.s8 %v279
        %v281 = vlaneseq
        %v282 = vshrl.u32 %v281, 7
        %v283 = vsub.s32 %v280, %v282
        %v284 = vrot.slane %v277, %v283
        %v286 = vunpack.c.l.s4 1983009808
        %v287 = vunpack.c.0.s8 %v286
        %v288 = vlaneseq
        %v289 = vshrl.u32 %v288, 7
        %v290 = vsub.s32 %v287, %v289
        %v291 = vrot.slane %v275, %v290
        %292 = vrot.lane.b32.xlu0 %v284, 126
        %v293 = vpop.permute.xlu0 %292
        %v294 = vcombine.low %v291, %v291
        %295 = vrot.lane.b32.xlu0 %v294, 124
        %v296 = vpop.permute.xlu0 %295
        %vm297 = vcmask 1041408
        %v300 = vsel %vm297, %v275, %v293
        %vm301 = vcmask 1043456
        %v303 = vsel %vm301, %v300, %v296
        %v304 = vld [vmem:[%s1] sm:$0xf]
        %v305 = vld [vmem:[%s2] sm:$0xff]
        %307 = vset.pattern.permute.xlu0 0
        %308 = vperm.xlu0 %307, %v305
        %v309 = vpop.permute.xlu0 %308
        %vm311 = vcmask 97280
        %v313 = vsel %vm311, %v304, 0
        %vm315 = vcmask 1045504
        %v316 = vsel %vm315, %v303, 0
        %318 = vmatprep.subr.bf16.mxu0 0
        %319 = vmatpush1.bf16.msra.mxu0 %v316
        %320 = vmatprep.subr.bf16.mxu0 0
        %321 = vmatpush1.bf16.msra.mxu0 0
        %322 = vmatprep.subr.bf16.mxu0 0
        %323 = vmatpush1.bf16.msra.mxu0 0
        %324 = vmatprep.subr.bf16.mxu0 0
        %325 = vmatpush1.bf16.msra.mxu0 0
        %326 = vmatprep.subr.bf16.mxu0 0
        %327 = vmatpush1.bf16.msra.mxu0 0
        %328 = vmatprep.subr.bf16.mxu0 0
        %329 = vmatpush1.bf16.msra.mxu0 0
        %330 = vmatprep.subr.bf16.mxu0 0
        %331 = vmatpush1.bf16.msra.mxu0 0
        %332 = vmatprep.subr.bf16.mxu0 0
        %333 = vmatpush1.bf16.msra.mxu0 0
        %334 = vmatprep.subr.bf16.mxu0 0
        %335 = vmatpush1.bf16.msra.mxu0 0
        %336 = vmatprep.subr.bf16.mxu0 0
        %337 = vmatpush1.bf16.msra.mxu0 0
        %338 = vmatprep.subr.bf16.mxu0 0
        %339 = vmatpush1.bf16.msra.mxu0 0
        %340 = vmatprep.subr.bf16.mxu0 0
        %341 = vmatpush1.bf16.msra.mxu0 0
        %342 = vmatprep.subr.bf16.mxu0 0
        %343 = vmatpush1.bf16.msra.mxu0 0
        %344 = vmatprep.subr.bf16.mxu0 0
        %345 = vmatpush1.bf16.msra.mxu0 0
        %346 = vmatprep.subr.bf16.mxu0 0
        %347 = vmatpush1.bf16.msra.mxu0 0
        %348 = vmatprep.subr.bf16.mxu0 0
        %349 = vmatpush1.bf16.msra.mxu0 0
        %350 = vmatprep.mubr.bf16.mxu0 0
        %351 = vmatmul.mubr.bf16.gmra.mrb[0].mxu0 %v313
        %v352 = vpop.f32.mrb[0].mxu0
        %v353 = vadd.f32 %v309, %v352
        %v354 = vpop.f32.mrb[0].mxu0
        %v355 = vpop.f32.mrb[0].mxu0
        %v356 = vpop.f32.mrb[0].mxu0
        %357 = vdwg.mxu0
        %v358 = vmax.f32 %v353, 0.0
        %vm359 = vcmask 31744
        %360 = vst.msk [vmem:[#allocation2] sm:$0xff] %vm359, 0.0
        %362 = vrot.lane.b32.xlu0 %v358, 4
        %v363 = vpop.permute.xlu0 %362
        %vm365 = vcmask 162848
        %366 = vst.msk [vmem:[#allocation2] sm:$0xff] %vm365, %v363
        %v367 = vld [vmem:[#allocation2] sm:$0xff]
        %369 = vrot.lane.b32.xlu0 %v367, 126
        %v370 = vpop.permute.xlu0 %369
        %372 = vrot.lane.b32.xlu0 %v367, 124
        %v373 = vpop.permute.xlu0 %372
        %v375 = vpack.c.bf16 %v370, %v367
        %v376 = vpack.c.bf16 %v373, %v373
        %v377 = vld [vmem:[%s3] sm:$0xf]
        %v378 = vld [vmem:[%s4] sm:$0xff]
        %380 = vset.pattern.permute.xlu0 0
        %381 = vperm.xlu0 %380, %v378
        %v382 = vpop.permute.xlu0 %381
        %vm384 = vcmask 195584
        %v386 = vsel %vm384, %v377, 0
        %v389 = vsel %vm301, %v376, 0
        %391 = vmatprep.subr.bf16.mxu0 0
        %392 = vmatpush1.bf16.msra.mxu0 %v375
        %393 = vmatprep.subr.bf16.mxu0 0
        %394 = vmatpush1.bf16.msra.mxu0 %v389
        %395 = vmatprep.subr.bf16.mxu0 0
        %396 = vmatpush1.bf16.msra.mxu0 0
        %397 = vmatprep.subr.bf16.mxu0 0
        %398 = vmatpush1.bf16.msra.mxu0 0
        %399 = vmatprep.subr.bf16.mxu0 0
        %400 = vmatpush1.bf16.msra.mxu0 0
        %401 = vmatprep.subr.bf16.mxu0 0
        %402 = vmatpush1.bf16.msra.mxu0 0
        %403 = vmatprep.subr.bf16.mxu0 0
        %404 = vmatpush1.bf16.msra.mxu0 0
        %405 = vmatprep.subr.bf16.mxu0 0
        %406 = vmatpush1.bf16.msra.mxu0 0
        %407 = vmatprep.subr.bf16.mxu0 0
        %408 = vmatpush1.bf16.msra.mxu0 0
        %409 = vmatprep.subr.bf16.mxu0 0
        %410 = vmatpush1.bf16.msra.mxu0 0
        %411 = vmatprep.subr.bf16.mxu0 0
        %412 = vmatpush1.bf16.msra.mxu0 0
        %413 = vmatprep.subr.bf16.mxu0 0
        %414 = vmatpush1.bf16.msra.mxu0 0
        %415 = vmatprep.subr.bf16.mxu0 0
        %416 = vmatpush1.bf16.msra.mxu0 0
        %417 = vmatprep.subr.bf16.mxu0 0
        %418 = vmatpush1.bf16.msra.mxu0 0
        %419 = vmatprep.subr.bf16.mxu0 0
        %420 = vmatpush1.bf16.msra.mxu0 0
        %421 = vmatprep.subr.bf16.mxu0 0
        %422 = vmatpush1.bf16.msra.mxu0 0
        %423 = vmatprep.mubr.bf16.mxu0 0
        %424 = vmatmul.mubr.bf16.gmra.mrb[0].mxu0 %v386
        %v425 = vpop.f32.mrb[0].mxu0
        %v426 = vadd.f32 %v382, %v425
        %v427 = vpop.f32.mrb[0].mxu0
        %v428 = vpop.f32.mrb[0].mxu0
        %v429 = vpop.f32.mrb[0].mxu0
        %430 = vdwg.mxu0
        %v431 = vmax.f32 %v426, 0.0
        %v432 = vld [vmem:[%s5] sm:$0xf]
        %v433 = vld [vmem:[%s273] sm:$0x3]
        %v434 = vld [vmem:[%s6] sm:$0xff]
        %436 = vset.pattern.permute.xlu0 0
        %437 = vperm.xlu0 %436, %v434
        %v438 = vpop.permute.xlu0 %437
        %v442 = vunpack.c.l.s4 1983009808
        %v443 = vunpack.c.0.s8 %v442
        %v444 = vlaneseq
        %v445 = vshrl.u32 %v444, 7
        %v446 = vsub.s32 %v443, %v445
        %v447 = vrot.slane %v433, %v446
        %448 = vrot.lane.b32.xlu0 %v447, 124
        %v449 = vpop.permute.xlu0 %448
        %v451 = vsel %vm359, %v432, 0
        %v454 = vsel %vm297, %v449, 0
        %456 = vmatprep.subr.bf16.mxu0 0
        %457 = vmatpush1.bf16.msra.mxu0 %v454
        %458 = vmatprep.subr.bf16.mxu0 0
        %459 = vmatpush1.bf16.msra.mxu0 0
        %460 = vmatprep.subr.bf16.mxu0 0
        %461 = vmatpush1.bf16.msra.mxu0 0
        %462 = vmatprep.subr.bf16.mxu0 0
        %463 = vmatpush1.bf16.msra.mxu0 0
        %464 = vmatprep.subr.bf16.mxu0 0
        %465 = vmatpush1.bf16.msra.mxu0 0
        %466 = vmatprep.subr.bf16.mxu0 0
        %467 = vmatpush1.bf16.msra.mxu0 0
        %468 = vmatprep.subr.bf16.mxu0 0
        %469 = vmatpush1.bf16.msra.mxu0 0
        %470 = vmatprep.subr.bf16.mxu0 0
        %471 = vmatpush1.bf16.msra.mxu0 0
        %472 = vmatprep.subr.bf16.mxu0 0
        %473 = vmatpush1.bf16.msra.mxu0 0
        %474 = vmatprep.subr.bf16.mxu0 0
        %475 = vmatpush1.bf16.msra.mxu0 0
        %476 = vmatprep.subr.bf16.mxu0 0
        %477 = vmatpush1.bf16.msra.mxu0 0
        %478 = vmatprep.subr.bf16.mxu0 0
        %479 = vmatpush1.bf16.msra.mxu0 0
        %480 = vmatprep.subr.bf16.mxu0 0
        %481 = vmatpush1.bf16.msra.mxu0 0
        %482 = vmatprep.subr.bf16.mxu0 0
        %483 = vmatpush1.bf16.msra.mxu0 0
        %484 = vmatprep.subr.bf16.mxu0 0
        %485 = vmatpush1.bf16.msra.mxu0 0
        %486 = vmatprep.subr.bf16.mxu0 0
        %487 = vmatpush1.bf16.msra.mxu0 0
        %488 = vmatprep.mubr.bf16.mxu0 0
        %489 = vmatmul.mubr.bf16.gmra.mrb[0].mxu0 %v451
        %v490 = vpop.f32.mrb[0].mxu0
        %v491 = vadd.f32 %v438, %v490
        %v492 = vpop.f32.mrb[0].mxu0
        %v493 = vpop.f32.mrb[0].mxu0
        %v494 = vpop.f32.mrb[0].mxu0
        %495 = vdwg.mxu0
        %v496 = vadd.f32 %v431, %v491
        %vm497 = vcmask 130048
        %498 = vst.msk [vmem:[%s269] sm:$0xff] %vm497, %v496
        %s499 = sand.u32 %s181, 1
        %s500 = scalar_lea.sflag [#allocation4], %s499
        %s501 = sand.u32 %s181, 1
        %s502 = smul.addr %s501, 8
        %s503 = scalar_lea.vmem [#allocation3], %s502
        // Predicated region
        $region49: #{tpu_custom_call.1} parent=47 // pred_check
          %p504 = pneg %p191
        $region50: #{tpu_custom_call.1} parent=47 // pred_check_branch
          %506 = sbr.rel (%p504) target = $region52
        $region51: #{tpu_custom_call.1} parent=47 // pred_region
          %s508 = ssub.s32 128, 128
          %509 = vsyncadd %s500, %s508
          %s510 = smul.addr %s21, 128
          %s511 = scalar_lea.hbm %s7, %s510
          %s513 = sshll.u32 %s503, 4
          %s514 = int_to_ptr.vmem [resolvable:$true] %s513
          %516 = dma.vmem_to_hbm [thread:$0]  %s514, 128, %s511, %s500
        $region52: #{tpu_custom_call.1} parent=47 // pred_fallthru
          _
      $region48: #{tpu_custom_call.1} parent=5 // pred_fallthru
        _
      %p517 = scmp.le.s32.totalorder 2, %s16
      // Predicated region
      $region53: #{tpu_custom_call.1} parent=5 // pred_check
        %p518 = pneg %p517
      $region54: #{tpu_custom_call.1} parent=5 // pred_check_branch
        %520 = sbr.rel (%p518) target = $region56
      $region55: #{tpu_custom_call.1} parent=5 // pred_region
        %s521 = ssub.s32 %s16, 2
        // Predicated region
        $region57: #{tpu_custom_call.1} parent=55 // pred_check
          %p522 = pneg %p197
        $region58: #{tpu_custom_call.1} parent=55 // pred_check_branch
          %524 = sbr.rel (%p522) target = $region60
        $region59: #{tpu_custom_call.1} parent=55 // pred_region
          %s525 = sand.u32 %s182, 1
          %s526 = scalar_lea.sflag [#allocation4], %s525
          %s527 = sand.u32 %s182, 1
          %s528 = smul.addr %s527, 8
          %s529 = scalar_lea.vmem [#allocation3], %s528
          %530 = dma.done %s526, 128
        $region60: #{tpu_custom_call.1} parent=55 // pred_fallthru
          _
      $region56: #{tpu_custom_call.1} parent=5 // pred_fallthru
        _
    $region6: #{tpu_custom_call.1} parent=1 // loop_footer
      %s20 = sadd.s32 1, %s16
    $region7: #{tpu_custom_call.1} parent=1 // loop_footer_branch
      %15 = sbr.rel target = $region3
    $region8: #{tpu_custom_call.1} parent=1 // loop_exit
      _
    %531 = vsyncpa [#allocation4], 1
    %s532 = scalar_lea.sflag [#allocation4], 1
    %533 = vsyncpa %s532, 1

</llo_original>
